<compile_context>
chip_gen: v6e
topology: v6e:2x2x1
jax: 0.10.0
libtpu: 0.0.40
codegen_flags: <defaults>
</compile_context>

<pallas_src>
import jax
import jax.numpy as jnp
from jax import lax
from jax.experimental import pallas as pl
from jax.experimental.pallas import tpu as pltpu


def _round_up(x, m):
    return (x + m - 1) // m * m


def _make_ffn_kernel(e_valid, e_pad):
    """Kernel factory. e_valid = real embedding dim, e_pad = lane-padded dim."""
    inv_e = 1.0 / float(e_valid)

    def ffn_kernel(x_ref, w1_ref, b1_ref, w2_ref, b2_ref, g_ref, be_ref, o_ref):
        x = x_ref[...]                                              # [TN, Ep], input dtype

        # linear1 + relu  (MXU matmul, f32 accumulation)
        h = jnp.dot(x, w1_ref[...], preferred_element_type=jnp.float32)
        h = jnp.maximum(h + b1_ref[...], 0.0)                       # [TN, Hp] f32

        # linear2 (cast h to the weight dtype so bf16 weights hit the fast MXU path;
        # no-op for f32 weights)
        y = jnp.dot(h.astype(w2_ref.dtype), w2_ref[...],
                    preferred_element_type=jnp.float32)
        y = y + b2_ref[...]                                         # [TN, Ep] f32

        # TODO(synk): dropout is identity here (inference mode); training-mode
        # dropout would use pltpu.prng_seed / pltpu.prng_random_bits.

        # residual (f32 epilogue; cast is a no-op when x is already f32)
        r = y + x.astype(jnp.float32)

        # LayerNorm over the *valid* E lanes. Padded lanes of r are exactly zero
        # (zero-padded x, W2 columns, b2), so the sum only needs a masked variance.
        if e_valid == e_pad:
            mean = jnp.mean(r, axis=-1, keepdims=True)
            d = r - mean
            var = jnp.mean(d * d, axis=-1, keepdims=True)
        else:
            lane = lax.broadcasted_iota(jnp.int32, r.shape, 1)
            mask = lane < e_valid
            mean = jnp.sum(r, axis=-1, keepdims=True) * inv_e
            d = jnp.where(mask, r - mean, 0.0)
            var = jnp.sum(d * d, axis=-1, keepdims=True) * inv_e

        norm = d * lax.rsqrt(var + 1e-5)
        # gamma/beta are zero in padded lanes -> padded output lanes are zero.
        o_ref[...] = (norm * g_ref[...] + be_ref[...]).astype(o_ref.dtype)

    return ffn_kernel


def position_wise_feed_forward(x, w1, b1, w2, b2, gamma, beta, *, tile_n=512):
    """x: [B, S, E]; w1: [E, H]; b1: [H]; w2: [H, E]; b2: [E]; gamma/beta: [E].

    Weights are stored pre-transposed relative to torch's nn.Linear layout.
    """
    B, S, E = x.shape
    H = w1.shape[1]
    N = B * S

    # Lane-dense padding: E, H -> multiples of 128 (unmasked stores, aligned MXU dims).
    Ep = _round_up(E, 128)
    Hp = _round_up(H, 128)

    # Row tile: multiple of 8, at most tile_n; pad N so the grid divides evenly.
    tn = _round_up(min(tile_n, _round_up(N, 8)), 8)
    Np = _round_up(N, tn)

    f32 = jnp.float32
    x2d = jnp.zeros((Np, Ep), x.dtype).at[:N, :E].set(x.reshape(N, E))
    w1p = jnp.zeros((Ep, Hp), w1.dtype).at[:E, :H].set(w1)
    b1p = jnp.zeros((1, Hp), f32).at[0, :H].set(b1.astype(f32))
    w2p = jnp.zeros((Hp, Ep), w2.dtype).at[:H, :E].set(w2)
    b2p = jnp.zeros((1, Ep), f32).at[0, :E].set(b2.astype(f32))
    gp = jnp.zeros((1, Ep), f32).at[0, :E].set(gamma.astype(f32))
    bp = jnp.zeros((1, Ep), f32).at[0, :E].set(beta.astype(f32))

    # Scoped VMEM budget from the actual tile footprint (x/out double-buffered,
    # weights resident, f32 hidden intermediate), with 2x headroom; capped at
    # 48 MiB so it also fits v7x's 64 MiB physical VMEM.
    isz = x.dtype.itemsize
    wsz = w1.dtype.itemsize
    needed = (
        2 * tn * Ep * isz            # double-buffered x tiles
        + 2 * tn * Ep * isz          # double-buffered out tiles
        + 2 * 2 * Ep * Hp * wsz      # W1 + W2 (resident)
        + 2 * (Hp + 3 * Ep) * 4      # biases / affine params
        + tn * Hp * 4                # f32 hidden intermediate
        + 2 * tn * Ep * 4            # f32 epilogue temporaries
    )
    vmem_limit = int(min(max(2 * needed, 32 << 20), 48 << 20))

    grid = (Np // tn,)
    out2d = pl.pallas_call(
        _make_ffn_kernel(E, Ep),
        out_shape=jax.ShapeDtypeStruct((Np, Ep), x.dtype),
        grid_spec=pltpu.PrefetchScalarGridSpec(
            num_scalar_prefetch=0,
            grid=grid,
            in_specs=[
                pl.BlockSpec((tn, Ep), lambda i: (i, 0)),   # x rows (pipelined)
                pl.BlockSpec((Ep, Hp), lambda i: (0, 0)),   # W1 (resident)
                pl.BlockSpec((1, Hp), lambda i: (0, 0)),    # b1
                pl.BlockSpec((Hp, Ep), lambda i: (0, 0)),   # W2 (resident)
                pl.BlockSpec((1, Ep), lambda i: (0, 0)),    # b2
                pl.BlockSpec((1, Ep), lambda i: (0, 0)),    # layernorm gamma
                pl.BlockSpec((1, Ep), lambda i: (0, 0)),    # layernorm beta
            ],
            out_specs=pl.BlockSpec((tn, Ep), lambda i: (i, 0)),
        ),
        compiler_params=pltpu.CompilerParams(
            dimension_semantics=("parallel",),   # rows independent -> megacore on v7x
            vmem_limit_bytes=vmem_limit,
        ),
    )(x2d, w1p, b1p, w2p, b2p, gp, bp)

    return out2d[:N, :E].reshape(B, S, E)


def _reference(x, w1, b1, w2, b2, gamma, beta):
    h = jnp.maximum(x @ w1 + b1, 0.0)
    y = h @ w2 + b2
    r = y + x
    mean = jnp.mean(r, axis=-1, keepdims=True)
    var = jnp.mean((r - mean) ** 2, axis=-1, keepdims=True)
    return (r - mean) / jnp.sqrt(var + 1e-5) * gamma + beta


if __name__ == "__main__":
    # Small shapes implied by the module: args.embedding_size=32, args.hidden_size=64
    B, S, E, H = 2, 8, 32, 64

    key = jax.random.PRNGKey(0)
    kx, k1, kb1, k2, kb2 = jax.random.split(key, 5)

    x = jax.random.normal(kx, (B, S, E), dtype=jnp.float32)

    # Deterministic parameter init mimicking nn.Linear's uniform(-1/sqrt(fan_in), ...)
    lim1 = 1.0 / (E ** 0.5)
    lim2 = 1.0 / (H ** 0.5)
    # Weights stored pre-transposed: torch linear1 weight [H, E] -> here [E, H].
    w1 = jax.random.uniform(k1, (E, H), jnp.float32, -lim1, lim1)
    b1 = jax.random.uniform(kb1, (H,), jnp.float32, -lim1, lim1)
    w2 = jax.random.uniform(k2, (H, E), jnp.float32, -lim2, lim2)
    b2 = jax.random.uniform(kb2, (E,), jnp.float32, -lim2, lim2)
    gamma = jnp.ones((E,), jnp.float32)   # nn.LayerNorm default affine init
    beta = jnp.zeros((E,), jnp.float32)

    out = position_wise_feed_forward(x, w1, b1, w2, b2, gamma, beta)
    out = jax.block_until_ready(out)

    ref = _reference(x, w1, b1, w2, b2, gamma, beta)
    assert out.shape == (B, S, E)
    assert jnp.allclose(out, ref, atol=1e-5, rtol=1e-5), "mismatch vs reference"

    print("KERNEL_OK")
</pallas_src>

<mosaic_0001>
module attributes {stable_mosaic.version = 11 : i64} {
  func.func @ffn_kernel(%arg0: i32, %arg1: memref<16x128xf32, #tpu.memory_space<vmem>>, %arg2: memref<128x128xf32, #tpu.memory_space<vmem>>, %arg3: memref<1x128xf32, #tpu.memory_space<vmem>>, %arg4: memref<128x128xf32, #tpu.memory_space<vmem>>, %arg5: memref<1x128xf32, #tpu.memory_space<vmem>>, %arg6: memref<1x128xf32, #tpu.memory_space<vmem>>, %arg7: memref<1x128xf32, #tpu.memory_space<vmem>>, %arg8: memref<16x128xf32, #tpu.memory_space<vmem>>) attributes {dimension_semantics = [#tpu.dimension_semantics<parallel>], iteration_bounds = array<i64: 1>, scalar_prefetch = 0 : i64, scratch_operands = 0 : i64, tpu.core_type = #tpu.core_type<tc>, window_params = [{transform_indices = @transform_0, window_bounds = array<i64: 16, 128>}, {pipeline_mode = #tpu.pipeline_mode<synchronous>, transform_indices = @transform_1, window_bounds = array<i64: 128, 128>}, {pipeline_mode = #tpu.pipeline_mode<synchronous>, transform_indices = @transform_2, window_bounds = array<i64: 1, 128>}, {pipeline_mode = #tpu.pipeline_mode<synchronous>, transform_indices = @transform_3, window_bounds = array<i64: 128, 128>}, {pipeline_mode = #tpu.pipeline_mode<synchronous>, transform_indices = @transform_4, window_bounds = array<i64: 1, 128>}, {pipeline_mode = #tpu.pipeline_mode<synchronous>, transform_indices = @transform_5, window_bounds = array<i64: 1, 128>}, {pipeline_mode = #tpu.pipeline_mode<synchronous>, transform_indices = @transform_6, window_bounds = array<i64: 1, 128>}, {transform_indices = @transform_7, window_bounds = array<i64: 16, 128>}]} {
    %c0 = arith.constant 0 : index
    %c0_0 = arith.constant 0 : index
    %0 = vector.load %arg1[%c0, %c0_0] : memref<16x128xf32, #tpu.memory_space<vmem>>, vector<16x128xf32>
    %c0_1 = arith.constant 0 : index
    %c0_2 = arith.constant 0 : index
    %1 = vector.load %arg2[%c0_1, %c0_2] : memref<128x128xf32, #tpu.memory_space<vmem>>, vector<128x128xf32>
    %cst = arith.constant dense<0.000000e+00> : vector<16x128xf32>
    %2 = tpu.matmul %0, %1, %cst {dimension_numbers = #tpu.dot_dimension_numbers<[1], [0], [0], [1], [0, 0, 1, 1], [], []>} : vector<16x128xf32>, vector<128x128xf32>, vector<16x128xf32> -> vector<16x128xf32>
    %c0_3 = arith.constant 0 : index
    %c0_4 = arith.constant 0 : index
    %3 = vector.load %arg3[%c0_3, %c0_4] : memref<1x128xf32, #tpu.memory_space<vmem>>, vector<1x128xf32>
    %4 = vector.broadcast %3 : vector<1x128xf32> to vector<16x128xf32>
    %5 = arith.addf %2, %4 : vector<16x128xf32>
    %cst_5 = arith.constant 0.000000e+00 : f32
    %6 = vector.broadcast %cst_5 : f32 to vector<16x128xf32>
    %7 = arith.maximumf %5, %6 : vector<16x128xf32>
    %c0_6 = arith.constant 0 : index
    %c0_7 = arith.constant 0 : index
    %8 = vector.load %arg4[%c0_6, %c0_7] : memref<128x128xf32, #tpu.memory_space<vmem>>, vector<128x128xf32>
    %cst_8 = arith.constant dense<0.000000e+00> : vector<16x128xf32>
    %9 = tpu.matmul %7, %8, %cst_8 {dimension_numbers = #tpu.dot_dimension_numbers<[1], [0], [0], [1], [0, 0, 1, 1], [], []>} : vector<16x128xf32>, vector<128x128xf32>, vector<16x128xf32> -> vector<16x128xf32>
    %c0_9 = arith.constant 0 : index
    %c0_10 = arith.constant 0 : index
    %10 = vector.load %arg5[%c0_9, %c0_10] : memref<1x128xf32, #tpu.memory_space<vmem>>, vector<1x128xf32>
    %11 = vector.broadcast %10 : vector<1x128xf32> to vector<16x128xf32>
    %12 = arith.addf %9, %11 : vector<16x128xf32>
    %13 = arith.addf %12, %0 : vector<16x128xf32>
    %14 = tpu.iota {dimensions = array<i32: 1>} : vector<16x128xi32>
    %c32_i32 = arith.constant 32 : i32
    %15 = vector.broadcast %c32_i32 : i32 to vector<16x128xi32>
    %16 = arith.cmpi slt, %14, %15 : vector<16x128xi32>
    %cst_11 = arith.constant dense<0.000000e+00> : vector<16xf32>
    %17 = vector.multi_reduction <add>, %13, %cst_11 [1] : vector<16x128xf32> to vector<16xf32>
    %18 = vector.shape_cast %17 : vector<16xf32> to vector<16x1xf32>
    %cst_12 = arith.constant 3.125000e-02 : f32
    %19 = vector.broadcast %cst_12 : f32 to vector<16x1xf32>
    %20 = arith.mulf %18, %19 : vector<16x1xf32>
    %21 = vector.broadcast %20 : vector<16x1xf32> to vector<16x128xf32>
    %22 = arith.subf %13, %21 : vector<16x128xf32>
    %cst_13 = arith.constant 0.000000e+00 : f32
    %23 = vector.broadcast %cst_13 : f32 to vector<16x128xf32>
    %24 = arith.select %16, %22, %23 : vector<16x128xi1>, vector<16x128xf32>
    %25 = arith.mulf %24, %24 : vector<16x128xf32>
    %cst_14 = arith.constant dense<0.000000e+00> : vector<16xf32>
    %26 = vector.multi_reduction <add>, %25, %cst_14 [1] : vector<16x128xf32> to vector<16xf32>
    %27 = vector.shape_cast %26 : vector<16xf32> to vector<16x1xf32>
    %cst_15 = arith.constant 3.125000e-02 : f32
    %28 = vector.broadcast %cst_15 : f32 to vector<16x1xf32>
    %29 = arith.mulf %27, %28 : vector<16x1xf32>
    %cst_16 = arith.constant 9.99999974E-6 : f32
    %30 = vector.broadcast %cst_16 : f32 to vector<16x1xf32>
    %31 = arith.addf %29, %30 : vector<16x1xf32>
    %32 = math.rsqrt %31 : vector<16x1xf32>
    %33 = vector.broadcast %32 : vector<16x1xf32> to vector<16x128xf32>
    %34 = arith.mulf %24, %33 : vector<16x128xf32>
    %c0_17 = arith.constant 0 : index
    %c0_18 = arith.constant 0 : index
    %35 = vector.load %arg6[%c0_17, %c0_18] : memref<1x128xf32, #tpu.memory_space<vmem>>, vector<1x128xf32>
    %36 = vector.broadcast %35 : vector<1x128xf32> to vector<16x128xf32>
    %37 = arith.mulf %34, %36 : vector<16x128xf32>
    %c0_19 = arith.constant 0 : index
    %c0_20 = arith.constant 0 : index
    %38 = vector.load %arg7[%c0_19, %c0_20] : memref<1x128xf32, #tpu.memory_space<vmem>>, vector<1x128xf32>
    %39 = vector.broadcast %38 : vector<1x128xf32> to vector<16x128xf32>
    %40 = arith.addf %37, %39 : vector<16x128xf32>
    %c0_21 = arith.constant 0 : index
    %c0_22 = arith.constant 0 : index
    %41 = vector.load %arg8[%c0_21, %c0_22] : memref<16x128xf32, #tpu.memory_space<vmem>>, vector<16x128xf32>
    tpu.vector_store %arg8[%c0_21, %c0_22], %40 {strides = array<i32>} : memref<16x128xf32, #tpu.memory_space<vmem>>, vector<16x128xf32>,
    return
  }
  func.func @transform_0(%arg0: i32) -> (i32, i32) {
    %c0_i32 = arith.constant 0 : i32
    %c0_i32_0 = arith.constant 0 : i32
    return %arg0, %c0_i32 : i32, i32
  }
  func.func @transform_1(%arg0: i32) -> (i32, i32) {
    %c0_i32 = arith.constant 0 : i32
    %c0_i32_0 = arith.constant 0 : i32
    %c0_i32_1 = arith.constant 0 : i32
    return %c0_i32, %c0_i32_0 : i32, i32
  }
  func.func @transform_2(%arg0: i32) -> (i32, i32) {
    %c0_i32 = arith.constant 0 : i32
    %c0_i32_0 = arith.constant 0 : i32
    %c0_i32_1 = arith.constant 0 : i32
    return %c0_i32, %c0_i32_0 : i32, i32
  }
  func.func @transform_3(%arg0: i32) -> (i32, i32) {
    %c0_i32 = arith.constant 0 : i32
    %c0_i32_0 = arith.constant 0 : i32
    %c0_i32_1 = arith.constant 0 : i32
    return %c0_i32, %c0_i32_0 : i32, i32
  }
  func.func @transform_4(%arg0: i32) -> (i32, i32) {
    %c0_i32 = arith.constant 0 : i32
    %c0_i32_0 = arith.constant 0 : i32
    %c0_i32_1 = arith.constant 0 : i32
    return %c0_i32, %c0_i32_0 : i32, i32
  }
  func.func @transform_5(%arg0: i32) -> (i32, i32) {
    %c0_i32 = arith.constant 0 : i32
    %c0_i32_0 = arith.constant 0 : i32
    %c0_i32_1 = arith.constant 0 : i32
    return %c0_i32, %c0_i32_0 : i32, i32
  }
  func.func @transform_6(%arg0: i32) -> (i32, i32) {
    %c0_i32 = arith.constant 0 : i32
    %c0_i32_0 = arith.constant 0 : i32
    %c0_i32_1 = arith.constant 0 : i32
    return %c0_i32, %c0_i32_0 : i32, i32
  }
  func.func @transform_7(%arg0: i32) -> (i32, i32) {
    %c0_i32 = arith.constant 0 : i32
    %c0_i32_0 = arith.constant 0 : i32
    return %arg0, %c0_i32 : i32, i32
  }
}

</mosaic_0001>

<llo_original>
// kernel: tpu_custom_call.1
$region0: #{tpu_custom_call.1}
  #allocation0 [shape = 'u32[]', space=smem, size = 0x4, offset = 0x4, fixed_abs, tag = 'smem constant byte address 0x4 - core index']
  #allocation1 [shape = 'u32[144,128]{1,0:T(1,128)}', space=vmem, size = 0x12000, scoped, tag = 'internal scratch']
  %s0 = inlined_call_operand.hbm [shape: f32[16,128], index: 0, kind: input, shape index: {}]
  %s1 = inlined_call_operand.hbm [shape: f32[128,128], index: 1, kind: input, shape index: {}]
  %s2 = inlined_call_operand.vmem [shape: f32[1,128], index: 2, kind: input, shape index: {}]
  %s3 = inlined_call_operand.hbm [shape: f32[128,128], index: 3, kind: input, shape index: {}]
  %s4 = inlined_call_operand.vmem [shape: f32[1,128], index: 4, kind: input, shape index: {}]
  %s5 = inlined_call_operand.vmem [shape: f32[1,128], index: 5, kind: input, shape index: {}]
  %s6 = inlined_call_operand.vmem [shape: f32[1,128], index: 6, kind: input, shape index: {}]
  %s7 = inlined_call_operand.hbm [shape: f32[16,128], index: 7, kind: output, shape index: {}]
  %s8 = sld [smem:[#allocation0]]
  $region50: #{tpu_custom_call.1} parent=0
    _
  %s10 = ssub.s32 1, %s8
  %s11 = scalar_select 0, %s10, %s8
  $region1: #{tpu_custom_call.1} parent=0
    #allocation2 [shape = 'u8[8192]{0}', space=vmem, size = 0x2000, scoped, tag = 'input window, operand 0, single buffered']
    #allocation3 [shape = 's32[1]{0}', space=sflag, size = 0x4, scoped, tag = 'scoped memory for tpu_custom_call.1']
    #allocation4 [shape = 's32[1]{0}', space=sflag, size = 0x4, scoped, tag = 'scoped memory for tpu_custom_call.1']
    #allocation5 [shape = 'u8[65536]{0}', space=vmem, size = 0x10000, scoped, tag = 'input window, operand 1, single buffered']
    #allocation6 [shape = 's32[1]{0}', space=sflag, size = 0x4, scoped, tag = 'scoped memory for tpu_custom_call.1']
    #allocation7 [shape = 'u8[65536]{0}', space=vmem, size = 0x10000, scoped, tag = 'input window, operand 3, single buffered']
    #allocation8 [shape = 'u8[8192]{0}', space=vmem, size = 0x2000, scoped, tag = 'output window, operand 0, single buffered']
    %12 = vsyncpa [#allocation3], 0
    %13 = vsyncpa [#allocation6], 0
    %14 = vsyncpa [#allocation4], 0
    // Predicated region
    $region2: #{tpu_custom_call.1} parent=1 // pred_check
      _
    $region3: #{tpu_custom_call.1} parent=1 // pred_check_branch
      %16 = sbr.rel (0) target = $region5
    $region4: #{tpu_custom_call.1} parent=1 // pred_region
      %s18 = ssub.s32 256, 256
      %19 = vsyncadd [#allocation3], %s18
      %s20 = sshll.u32 [#allocation2], 4
      %s21 = int_to_ptr.vmem [resolvable:$true] %s20
      %26 = dma.hbm_to_vmem [thread:$0]  %s0, 256, %s21, [#allocation3], 128, 128, 8
    $region5: #{tpu_custom_call.1} parent=1 // pred_fallthru
      _
    // Predicated region
    $region6: #{tpu_custom_call.1} parent=1 // pred_check
      _
    $region7: #{tpu_custom_call.1} parent=1 // pred_check_branch
      %28 = sbr.rel (0) target = $region9
    $region8: #{tpu_custom_call.1} parent=1 // pred_region
      %s30 = ssub.s32 2048, 2048
      %31 = vsyncadd [#allocation6], %s30
      %s32 = sshll.u32 [#allocation5], 4
      %s33 = int_to_ptr.vmem [resolvable:$true] %s32
      %38 = dma.hbm_to_vmem [thread:$0]  %s1, 2048, %s33, [#allocation6], 128, 128, 8
    $region9: #{tpu_custom_call.1} parent=1 // pred_fallthru
      _
    // Predicated region
    $region10: #{tpu_custom_call.1} parent=1 // pred_check
      _
    $region11: #{tpu_custom_call.1} parent=1 // pred_check_branch
      %40 = sbr.rel (0) target = $region13
    $region12: #{tpu_custom_call.1} parent=1 // pred_region
      _
    $region13: #{tpu_custom_call.1} parent=1 // pred_fallthru
      _
    // Predicated region
    $region14: #{tpu_custom_call.1} parent=1 // pred_check
      _
    $region15: #{tpu_custom_call.1} parent=1 // pred_check_branch
      %42 = sbr.rel (0) target = $region17
    $region16: #{tpu_custom_call.1} parent=1 // pred_region
      %s44 = ssub.s32 2048, 2048
      %45 = vsyncadd [#allocation6], %s44
      %s46 = sshll.u32 [#allocation7], 4
      %s47 = int_to_ptr.vmem [resolvable:$true] %s46
      %52 = dma.hbm_to_vmem [thread:$0]  %s3, 2048, %s47, [#allocation6], 128, 128, 8
    $region17: #{tpu_custom_call.1} parent=1 // pred_fallthru
      _
    // Predicated region
    $region18: #{tpu_custom_call.1} parent=1 // pred_check
      _
    $region19: #{tpu_custom_call.1} parent=1 // pred_check_branch
      %54 = sbr.rel (0) target = $region21
    $region20: #{tpu_custom_call.1} parent=1 // pred_region
      _
    $region21: #{tpu_custom_call.1} parent=1 // pred_fallthru
      _
    // Predicated region
    $region22: #{tpu_custom_call.1} parent=1 // pred_check
      _
    $region23: #{tpu_custom_call.1} parent=1 // pred_check_branch
      %56 = sbr.rel (0) target = $region25
    $region24: #{tpu_custom_call.1} parent=1 // pred_region
      _
    $region25: #{tpu_custom_call.1} parent=1 // pred_fallthru
      _
    // Predicated region
    $region26: #{tpu_custom_call.1} parent=1 // pred_check
      _
    $region27: #{tpu_custom_call.1} parent=1 // pred_check_branch
      %58 = sbr.rel (0) target = $region29
    $region28: #{tpu_custom_call.1} parent=1 // pred_region
      _
    $region29: #{tpu_custom_call.1} parent=1 // pred_fallthru
      _
    // Predicated region
    $region30: #{tpu_custom_call.1} parent=1 // pred_check
      _
    $region31: #{tpu_custom_call.1} parent=1 // pred_check_branch
      %60 = sbr.rel (0) target = $region33
    $region32: #{tpu_custom_call.1} parent=1 // pred_region
      %61 = dma.done [#allocation3], 256
    $region33: #{tpu_custom_call.1} parent=1 // pred_fallthru
      _
    // Predicated region
    $region34: #{tpu_custom_call.1} parent=1 // pred_check
      _
    $region35: #{tpu_custom_call.1} parent=1 // pred_check_branch
      %63 = sbr.rel (0) target = $region37
    $region36: #{tpu_custom_call.1} parent=1 // pred_region
      %64 = dma.done [#allocation6], 2048
    $region37: #{tpu_custom_call.1} parent=1 // pred_fallthru
      _
    // Predicated region
    $region38: #{tpu_custom_call.1} parent=1 // pred_check
      _
    $region39: #{tpu_custom_call.1} parent=1 // pred_check_branch
      %66 = sbr.rel (0) target = $region41
    $region40: #{tpu_custom_call.1} parent=1 // pred_region
      %67 = dma.done [#allocation6], 2048
    $region41: #{tpu_custom_call.1} parent=1 // pred_fallthru
      _
    %v68 = vld [vmem:[#allocation2] sm:$0xff]
    %v69 = vld [vmem:[#allocation2 + $0x8] sm:$0xff]
    %v70 = vld [vmem:[#allocation5] sm:$0xff]
    %v71 = vld [vmem:[#allocation5 + $0x8] sm:$0xff]
    %v72 = vld [vmem:[#allocation5 + $0x10] sm:$0xff]
    %v73 = vld [vmem:[#allocation5 + $0x18] sm:$0xff]
    %v74 = vld [vmem:[#allocation5 + $0x20] sm:$0xff]
    %v75 = vld [vmem:[#allocation5 + $0x28] sm:$0xff]
    %v76 = vld [vmem:[#allocation5 + $0x30] sm:$0xff]
    %v77 = vld [vmem:[#allocation5 + $0x38] sm:$0xff]
    %v78 = vld [vmem:[#allocation5 + $0x40] sm:$0xff]
    %v79 = vld [vmem:[#allocation5 + $0x48] sm:$0xff]
    %v80 = vld [vmem:[#allocation5 + $0x50] sm:$0xff]
    %v81 = vld [vmem:[#allocation5 + $0x58] sm:$0xff]
    %v82 = vld [vmem:[#allocation5 + $0x60] sm:$0xff]
    %v83 = vld [vmem:[#allocation5 + $0x68] sm:$0xff]
    %v84 = vld [vmem:[#allocation5 + $0x70] sm:$0xff]
    %v85 = vld [vmem:[#allocation5 + $0x78] sm:$0xff]
    %v86 = vld [vmem:[%s2] sm:$0x1]
    %v88 = vlaneseq
    %v89 = vshrl.u32 %v88, 7
    %v90 = vsub.s32 0, %v89
    %v91 = vrot.slane %v86, %v90
    %93 = vmatprep.subr.mxu0 0.0
    %94 = vmatpush1.msra.mxu0 %v85
    %95 = vmatprep.subr.mxu0 0.0
    %96 = vmatpush1.msra.mxu0 %v84
    %97 = vmatprep.subr.mxu0 0.0
    %98 = vmatpush1.msra.mxu0 %v83
    %99 = vmatprep.subr.mxu0 0.0
    %100 = vmatpush1.msra.mxu0 %v82
    %101 = vmatprep.subr.mxu0 0.0
    %102 = vmatpush1.msra.mxu0 %v81
    %103 = vmatprep.subr.mxu0 0.0
    %104 = vmatpush1.msra.mxu0 %v80
    %105 = vmatprep.subr.mxu0 0.0
    %106 = vmatpush1.msra.mxu0 %v79
    %107 = vmatprep.subr.mxu0 0.0
    %108 = vmatpush1.msra.mxu0 %v78
    %109 = vmatprep.subr.mxu0 0.0
    %110 = vmatpush1.msra.mxu0 %v77
    %111 = vmatprep.subr.mxu0 0.0
    %112 = vmatpush1.msra.mxu0 %v76
    %113 = vmatprep.subr.mxu0 0.0
    %114 = vmatpush1.msra.mxu0 %v75
    %115 = vmatprep.subr.mxu0 0.0
    %116 = vmatpush1.msra.mxu0 %v74
    %117 = vmatprep.subr.mxu0 0.0
    %118 = vmatpush1.msra.mxu0 %v73
    %119 = vmatprep.subr.mxu0 0.0
    %120 = vmatpush1.msra.mxu0 %v72
    %121 = vmatprep.subr.mxu0 0.0
    %122 = vmatpush1.msra.mxu0 %v71
    %123 = vmatprep.subr.mxu0 0.0
    %124 = vmatpush1.msra.mxu0 %v70
    %125 = vmatprep.subr.mxu0 0.0
    %126 = vmatpush2.msra.mxu0 0.0
    %127 = vmatprep.subr.mxu0 0.0
    %128 = vmatpush2.msra.mxu0 0.0
    %129 = vmatprep.subr.mxu0 0.0
    %130 = vmatpush2.msra.mxu0 0.0
    %131 = vmatprep.subr.mxu0 0.0
    %132 = vmatpush2.msra.mxu0 0.0
    %133 = vmatprep.subr.mxu0 0.0
    %134 = vmatpush2.msra.mxu0 0.0
    %135 = vmatprep.subr.mxu0 0.0
    %136 = vmatpush2.msra.mxu0 0.0
    %137 = vmatprep.subr.mxu0 0.0
    %138 = vmatpush2.msra.mxu0 0.0
    %139 = vmatprep.subr.mxu0 0.0
    %140 = vmatpush2.msra.mxu0 0.0
    %141 = vmatprep.subr.mxu0 0.0
    %142 = vmatpush2.msra.mxu0 0.0
    %143 = vmatprep.subr.mxu0 0.0
    %144 = vmatpush2.msra.mxu0 0.0
    %145 = vmatprep.subr.mxu0 0.0
    %146 = vmatpush2.msra.mxu0 0.0
    %147 = vmatprep.subr.mxu0 0.0
    %148 = vmatpush2.msra.mxu0 0.0
    %149 = vmatprep.subr.mxu0 0.0
    %150 = vmatpush2.msra.mxu0 0.0
    %151 = vmatprep.subr.mxu0 0.0
    %152 = vmatpush2.msra.mxu0 0.0
    %153 = vmatprep.subr.mxu0 0.0
    %154 = vmatpush2.msra.mxu0 0.0
    %155 = vmatprep.subr.mxu0 0.0
    %156 = vmatpush2.msra.mxu0 0.0
    %157 = vmatprep.mubr.f32.mxu0 0.0
    %158 = vmatmul.mubr.f32.gmra.mxu0 %v68
    %v159 = vpop.f32.mrf.mxu0
    %v160 = vadd.f32 %v91, %v159
    %v161 = vpop.f32.mrf.mxu0
    %162 = vmatprep.mubr.f32.mxu0 0.0
    %163 = vmatmul.mubr.f32.gmra.mxu0 %v69
    %v164 = vpop.f32.mrf.mxu0
    %v165 = vadd.f32 %v91, %v164
    %v166 = vpop.f32.mrf.mxu0
    %167 = vdwg.mxu0
    %v168 = vmax.f32 %v160, 0.0
    %v169 = vmax.f32 %v165, 0.0
    %v170 = vld [vmem:[#allocation7] sm:$0xff]
    %v171 = vld [vmem:[#allocation7 + $0x8] sm:$0xff]
    %v172 = vld [vmem:[#allocation7 + $0x10] sm:$0xff]
    %v173 = vld [vmem:[#allocation7 + $0x18] sm:$0xff]
    %v174 = vld [vmem:[#allocation7 + $0x20] sm:$0xff]
    %v175 = vld [vmem:[#allocation7 + $0x28] sm:$0xff]
    %v176 = vld [vmem:[#allocation7 + $0x30] sm:$0xff]
    %v177 = vld [vmem:[#allocation7 + $0x38] sm:$0xff]
    %v178 = vld [vmem:[#allocation7 + $0x40] sm:$0xff]
    %v179 = vld [vmem:[#allocation7 + $0x48] sm:$0xff]
    %v180 = vld [vmem:[#allocation7 + $0x50] sm:$0xff]
    %v181 = vld [vmem:[#allocation7 + $0x58] sm:$0xff]
    %v182 = vld [vmem:[#allocation7 + $0x60] sm:$0xff]
    %v183 = vld [vmem:[#allocation7 + $0x68] sm:$0xff]
    %v184 = vld [vmem:[#allocation7 + $0x70] sm:$0xff]
    %v185 = vld [vmem:[#allocation7 + $0x78] sm:$0xff]
    %v186 = vld [vmem:[%s4] sm:$0x1]
    %v188 = vlaneseq
    %v189 = vshrl.u32 %v188, 7
    %v190 = vsub.s32 0, %v189
    %v191 = vrot.slane %v186, %v190
    %193 = vmatprep.subr.mxu0 0.0
    %194 = vmatpush1.msra.mxu0 %v185
    %195 = vmatprep.subr.mxu0 0.0
    %196 = vmatpush1.msra.mxu0 %v184
    %197 = vmatprep.subr.mxu0 0.0
    %198 = vmatpush1.msra.mxu0 %v183
    %199 = vmatprep.subr.mxu0 0.0
    %200 = vmatpush1.msra.mxu0 %v182
    %201 = vmatprep.subr.mxu0 0.0
    %202 = vmatpush1.msra.mxu0 %v181
    %203 = vmatprep.subr.mxu0 0.0
    %204 = vmatpush1.msra.mxu0 %v180
    %205 = vmatprep.subr.mxu0 0.0
    %206 = vmatpush1.msra.mxu0 %v179
    %207 = vmatprep.subr.mxu0 0.0
    %208 = vmatpush1.msra.mxu0 %v178
    %209 = vmatprep.subr.mxu0 0.0
    %210 = vmatpush1.msra.mxu0 %v177
    %211 = vmatprep.subr.mxu0 0.0
    %212 = vmatpush1.msra.mxu0 %v176
    %213 = vmatprep.subr.mxu0 0.0
    %214 = vmatpush1.msra.mxu0 %v175
    %215 = vmatprep.subr.mxu0 0.0
    %216 = vmatpush1.msra.mxu0 %v174
    %217 = vmatprep.subr.mxu0 0.0
    %218 = vmatpush1.msra.mxu0 %v173
    %219 = vmatprep.subr.mxu0 0.0
    %220 = vmatpush1.msra.mxu0 %v172
    %221 = vmatprep.subr.mxu0 0.0
    %222 = vmatpush1.msra.mxu0 %v171
    %223 = vmatprep.subr.mxu0 0.0
    %224 = vmatpush1.msra.mxu0 %v170
    %225 = vmatprep.subr.mxu0 0.0
    %226 = vmatpush2.msra.mxu0 0.0
    %227 = vmatprep.subr.mxu0 0.0
    %228 = vmatpush2.msra.mxu0 0.0
    %229 = vmatprep.subr.mxu0 0.0
    %230 = vmatpush2.msra.mxu0 0.0
    %231 = vmatprep.subr.mxu0 0.0
    %232 = vmatpush2.msra.mxu0 0.0
    %233 = vmatprep.subr.mxu0 0.0
    %234 = vmatpush2.msra.mxu0 0.0
    %235 = vmatprep.subr.mxu0 0.0
    %236 = vmatpush2.msra.mxu0 0.0
    %237 = vmatprep.subr.mxu0 0.0
    %238 = vmatpush2.msra.mxu0 0.0
    %239 = vmatprep.subr.mxu0 0.0
    %240 = vmatpush2.msra.mxu0 0.0
    %241 = vmatprep.subr.mxu0 0.0
    %242 = vmatpush2.msra.mxu0 0.0
    %243 = vmatprep.subr.mxu0 0.0
    %244 = vmatpush2.msra.mxu0 0.0
    %245 = vmatprep.subr.mxu0 0.0
    %246 = vmatpush2.msra.mxu0 0.0
    %247 = vmatprep.subr.mxu0 0.0
    %248 = vmatpush2.msra.mxu0 0.0
    %249 = vmatprep.subr.mxu0 0.0
    %250 = vmatpush2.msra.mxu0 0.0
    %251 = vmatprep.subr.mxu0 0.0
    %252 = vmatpush2.msra.mxu0 0.0
    %253 = vmatprep.subr.mxu0 0.0
    %254 = vmatpush2.msra.mxu0 0.0
    %255 = vmatprep.subr.mxu0 0.0
    %256 = vmatpush2.msra.mxu0 0.0
    %257 = vmatprep.mubr.f32.mxu0 0.0
    %258 = vmatmul.mubr.f32.gmra.mxu0 %v168
    %v259 = vpop.f32.mrf.mxu0
    %v260 = vadd.f32 %v191, %v259
    %v261 = vpop.f32.mrf.mxu0
    %262 = vmatprep.mubr.f32.mxu0 0.0
    %263 = vmatmul.mubr.f32.gmra.mxu0 %v169
    %v264 = vpop.f32.mrf.mxu0
    %v265 = vadd.f32 %v191, %v264
    %v266 = vpop.f32.mrf.mxu0
    %267 = vdwg.mxu0
    %v268 = vadd.f32 %v260, %v68
    %v269 = vadd.f32 %v265, %v69
    %v270 = vlaneseq
    %v271 = vand.u32 %v270, 127
    %vm272 = vcmp.lt.s32.totalorder %v271, 32
    %273 = vadd.xlane.f32.xlu0 %v268
    %v274 = vpop.xlane.xlu0 %273
    %275 = vadd.xlane.f32.xlu0 %v269
    %v276 = vpop.xlane.xlu0 %275
    %v277 = vmul.f32 %v274, 0.03125
    %v278 = vmul.f32 %v276, 0.03125
    %v279 = vsub.f32 %v268, %v277
    %v280 = vsub.f32 %v269, %v278
    %v281 = vsel %vm272, %v279, 0.0
    %v282 = vsel %vm272, %v280, 0.0
    %v283 = vmul.f32 %v281, %v281
    %v284 = vmul.f32 %v282, %v282
    %285 = vadd.xlane.f32.xlu0 %v283
    %v286 = vpop.xlane.xlu0 %285
    %287 = vadd.xlane.f32.xlu0 %v284
    %v288 = vpop.xlane.xlu0 %287
    %v289 = vmul.f32 %v286, 0.03125
    %v290 = vmul.f32 %v288, 0.03125
    %v291 = vadd.f32 %v289, 1e-05
    %v292 = vadd.f32 %v290, 1e-05
    %v293 = vrsqrt.pop %v291
    %v294 = vrsqrt.pop %v292
    %v295 = vmul.f32 %v281, %v293
    %v296 = vmul.f32 %v282, %v294
    %v297 = vld [vmem:[%s5] sm:$0x1]
    %v299 = vlaneseq
    %v300 = vshrl.u32 %v299, 7
    %v301 = vsub.s32 0, %v300
    %v302 = vrot.slane %v297, %v301
    %v304 = vmul.f32 %v295, %v302
    %v305 = vmul.f32 %v296, %v302
    %v306 = vld [vmem:[%s6] sm:$0x1]
    %v308 = vlaneseq
    %v309 = vshrl.u32 %v308, 7
    %v310 = vsub.s32 0, %v309
    %v311 = vrot.slane %v306, %v310
    %v313 = vadd.f32 %v304, %v311
    %v314 = vadd.f32 %v305, %v311
    %315 = vst [vmem:[#allocation8] sm:$0xff] %v313
    %316 = vst [vmem:[#allocation8 + $0x8] sm:$0xff] %v314
    // Predicated region
    $region42: #{tpu_custom_call.1} parent=1 // pred_check
      _
    $region43: #{tpu_custom_call.1} parent=1 // pred_check_branch
      %318 = sbr.rel (0) target = $region45
    $region44: #{tpu_custom_call.1} parent=1 // pred_region
      %s320 = ssub.s32 256, 256
      %321 = vsyncadd [#allocation4], %s320
      %s322 = sshll.u32 [#allocation8], 4
      %s323 = int_to_ptr.vmem [resolvable:$true] %s322
      %328 = dma.vmem_to_hbm [thread:$0]  %s323, 256, %s7, [#allocation4], 128, 128, 8
    $region45: #{tpu_custom_call.1} parent=1 // pred_fallthru
      _
    // Predicated region
    $region46: #{tpu_custom_call.1} parent=1 // pred_check
      _
    $region47: #{tpu_custom_call.1} parent=1 // pred_check_branch
      %330 = sbr.rel (0) target = $region49
    $region48: #{tpu_custom_call.1} parent=1 // pred_region
      %331 = dma.done [#allocation4], 256
    $region49: #{tpu_custom_call.1} parent=1 // pred_fallthru
      _
    %332 = vsyncpa [#allocation3], 1
    %333 = vsyncpa [#allocation6], 1
    %334 = vsyncpa [#allocation4], 1

</llo_original>
